<compile_context>
chip_gen: v7x
topology: tpu7x:2x2x1
jax: 0.10.0
libtpu: 0.0.40
codegen_flags: <defaults>
</compile_context>

<pallas_src>
import jax
import jax.numpy as jnp
from jax import lax
from jax.experimental import pallas as pl
from jax.experimental.pallas import tpu as pltpu

_LANE = 128
_SUBLANE = 8
_CONTRACT_LAST = (((1,), (1,)), ((), ()))   # contract last dim of both operands
_RESIDENT_MP_MAX = 1024                     # full (Mp, Mp) f32 acc <= 4 MiB
_STRIPE_BUDGET = 16 << 20                   # double-buffered (Mp, tk) stripes


def _round_up(x, m):
    return ((x + m - 1) // m) * m


def _vmem_limit(est_bytes):
    # Raise above the scoped default, leave headroom, stay inside v7x's 64 MiB.
    return int(min(max(32 << 20, int(est_bytes * 1.5) + (4 << 20)), 64 << 20))


def _plan(m, k):
    """Static tiling plan from the (unpadded) feature-matrix shape (m, k)."""
    mp8 = _round_up(max(m, _SUBLANE), _SUBLANE)
    kp128 = _round_up(max(k, _LANE), _LANE)
    if mp8 <= _RESIDENT_MP_MAX:
        split_k = 2 if kp128 >= 2 * _LANE else 1
        tk, kp = _LANE, _round_up(kp128, _LANE * split_k)
        for cand in (2048, 1024, 512, 256, 128):
            if 2 * mp8 * cand * 4 > _STRIPE_BUDGET:
                continue
            kp_cand = _round_up(kp128, cand * split_k)
            if kp_cand * 8 <= kp128 * 9:        # <= 12.5% zero-pad overhead
                tk, kp = cand, kp_cand
                break
        return dict(path="resident", mp=mp8, kp=kp, tk=tk, split_k=split_k,
                    nk=kp // (tk * split_k))
    # Fallback for very large M (compute-bound): classic tiled gram.
    tm = 128
    mp = _round_up(m, tm)
    tk, kp = _LANE, kp128
    for cand in (1024, 512, 256, 128):
        kp_cand = _round_up(kp128, cand)
        if kp_cand * 8 <= kp128 * 9:
            tk, kp = cand, kp_cand
            break
    return dict(path="tiled", mp=mp, kp=kp, tm=tm, tk=tk,
                ni=mp // tm, nk=kp // tk)


# ----------------------------------------------------------------------------
# Path A: K-streaming gram with a resident full (Mp, Mp) accumulator.
# ----------------------------------------------------------------------------
def _gram_resident_kernel(x_ref, out_ref, acc_ref):
    k = pl.program_id(1)
    nk = pl.num_programs(1)

    @pl.when(k == 0)
    def _():
        acc_ref[...] = jnp.zeros_like(acc_ref)

    x = x_ref[...]
    # One VMEM stripe feeds both MXU operands: G += X_k @ X_k.T
    acc_ref[...] += lax.dot_general(x, x, _CONTRACT_LAST,
                                    preferred_element_type=jnp.float32)

    @pl.when(k == nk - 1)
    def _():
        out_ref[...] = acc_ref[...]


def _gram_resident(feats, plan):
    mp, kp = feats.shape
    tk, split_k, nk = plan["tk"], plan["split_k"], plan["nk"]
    est = 2 * mp * tk * 4 + mp * mp * 4 + 2 * mp * mp * 4
    cost = pl.CostEstimate(
        flops=int(2 * mp * mp * kp), transcendentals=0,
        bytes_accessed=int(mp * kp * 4 + split_k * mp * mp * 4))
    partials = pl.pallas_call(
        _gram_resident_kernel,
        out_shape=jax.ShapeDtypeStruct((split_k, mp, mp), jnp.float32),
        grid_spec=pltpu.PrefetchScalarGridSpec(
            num_scalar_prefetch=0,
            grid=(split_k, nk),
            in_specs=[pl.BlockSpec((mp, tk), lambda c, kk: (0, c * nk + kk))],
            out_specs=pl.BlockSpec((None, mp, mp), lambda c, kk: (c, 0, 0)),
            scratch_shapes=[pltpu.VMEM((mp, mp), jnp.float32)]),
        compiler_params=pltpu.CompilerParams(
            dimension_semantics=("parallel", "arbitrary"),
            vmem_limit_bytes=_vmem_limit(est)),
        cost_estimate=cost,
    )(feats)
    # Combine per-core split-K partial grams (tiny) in XLA.
    return jnp.sum(partials, axis=0)


# ----------------------------------------------------------------------------
# Path B (fallback, Mp > 1024): classic (i, j, k) tiled gram.
# ----------------------------------------------------------------------------
def _gram_tiled_kernel(xr_ref, xc_ref, g_ref, acc_ref):
    k = pl.program_id(2)

    @pl.when(k == 0)
    def _():
        acc_ref[...] = jnp.zeros_like(acc_ref)

    acc_ref[...] += lax.dot_general(xr_ref[...], xc_ref[...], _CONTRACT_LAST,
                                    preferred_element_type=jnp.float32)

    @pl.when(k == pl.num_programs(2) - 1)
    def _():
        g_ref[...] = acc_ref[...]


def _gram_tiled(feats, plan):
    mp, kp = feats.shape
    tm, tk, ni, nk = plan["tm"], plan["tk"], plan["ni"], plan["nk"]
    est = 2 * 2 * tm * tk * 4 + 3 * tm * tm * 4
    cost = pl.CostEstimate(
        flops=int(2 * mp * mp * kp), transcendentals=0,
        bytes_accessed=int(2 * ni * mp * kp * 4 + mp * mp * 4))
    return pl.pallas_call(
        _gram_tiled_kernel,
        out_shape=jax.ShapeDtypeStruct((mp, mp), jnp.float32),
        grid_spec=pltpu.PrefetchScalarGridSpec(
            num_scalar_prefetch=0,
            grid=(ni, ni, nk),
            in_specs=[pl.BlockSpec((tm, tk), lambda i, j, kk: (i, kk)),
                      pl.BlockSpec((tm, tk), lambda i, j, kk: (j, kk))],
            out_specs=pl.BlockSpec((tm, tm), lambda i, j, kk: (i, j)),
            scratch_shapes=[pltpu.VMEM((tm, tm), jnp.float32)]),
        compiler_params=pltpu.CompilerParams(
            dimension_semantics=("parallel", "parallel", "arbitrary"),
            vmem_limit_bytes=_vmem_limit(est)),
        cost_estimate=cost,
    )(feats, feats)


# ----------------------------------------------------------------------------
# Wrappers.
# ----------------------------------------------------------------------------
@jax.jit
def gram_matrix_padded(x_bhwf):
    """Padded (Mp, Mp) gram of a (B, H, W, F) tensor, scaled by 1/(B*H*W*F).

    Zero-padded rows/cols produce zero gram entries, so padded grams of
    same-shape tensors can be compared directly: the sum of squared diffs over
    the padded matrix equals the sum over the original M x M gram.
    """
    b, h, w, f = x_bhwf.shape
    m, k = b * h, w * f
    plan = _plan(m, k)
    feats = x_bhwf.reshape(m, k).astype(jnp.float32)
    feats = jnp.pad(feats, ((0, plan["mp"] - m), (0, plan["kp"] - k)))
    if plan["path"] == "resident":
        g = _gram_resident(feats, plan)
    else:
        g = _gram_tiled(feats, plan)
    return g * (1.0 / float(m * k))


@jax.jit
def style_losses(x_bhwf, g_target1, g_target2):
    """(loss1, loss2) = (mse(G(x), G(t1)), mse(G(x), G(t2)))."""
    b, h, w, f = x_bhwf.shape
    m = b * h
    g = gram_matrix_padded(x_bhwf)
    inv_n = 1.0 / float(m * m)       # MSE mean over the ORIGINAL m x m gram
    d1 = g - g_target1
    d2 = g - g_target2
    return jnp.sum(d1 * d1) * inv_n, jnp.sum(d2 * d2) * inv_n


class UniverseStyleLoss:
    """Stateful mirror of the PyTorch module (forward returns its input)."""

    def __init__(self, target1, target2):
        assert target1.shape == target2.shape
        self.g_target1 = gram_matrix_padded(target1)
        self.g_target2 = gram_matrix_padded(target2)
        # mse(x, x) == 0, matching the PyTorch __init__ placeholder losses.
        self.loss1 = jnp.float32(0.0)
        self.loss2 = jnp.float32(0.0)
        self.loss = self.loss1 + self.loss2

    def __call__(self, x):
        self.loss1, self.loss2 = style_losses(x, self.g_target1, self.g_target2)
        self.loss = self.loss1 + self.loss2
        return x


# ----------------------------------------------------------------------------
# Self-test.
# ----------------------------------------------------------------------------
def _ref_gram(t):
    b, h, w, f = t.shape
    feats = t.reshape(b * h, w * f).astype(jnp.float32)
    return (feats @ feats.T) / (b * h * w * f)


def _check_case(key, shape):
    k1, k2, k3 = jax.random.split(key, 3)
    t1 = jax.random.normal(k1, shape, dtype=jnp.float32)
    t2 = jax.random.normal(k2, shape, dtype=jnp.float32)
    x = jax.random.normal(k3, shape, dtype=jnp.float32)

    module = UniverseStyleLoss(t1, t2)
    out = module(x)
    jax.block_until_ready((out, module.loss))

    gi, g1, g2 = _ref_gram(x), _ref_gram(t1), _ref_gram(t2)
    loss_ref = jnp.mean((gi - g1) ** 2) + jnp.mean((gi - g2) ** 2)

    assert out.shape == x.shape and jnp.allclose(out, x), \
        "forward must return its input unchanged"
    assert jnp.allclose(module.loss, loss_ref, rtol=1e-4, atol=1e-6), (
        shape, float(module.loss), float(loss_ref))


if __name__ == "__main__":
    key = jax.random.PRNGKey(0)
    ka, kb, kc = jax.random.split(key, 3)
    # (B, H, W, F): the module reshapes to (B*H, W*F).
    _check_case(ka, (2, 16, 16, 4))    # M=32,  K=64   -> single-tile grid
    _check_case(kb, (2, 32, 16, 96))   # M=64,  K=1536 -> split-K (2, 3) grid
    _check_case(kc, (1, 20, 8, 16))    # M=20 (pads to 24 rows), K=128
    print("KERNEL_OK")
</pallas_src>

<mosaic_0001>
module attributes {stable_mosaic.version = 11 : i64} {
  func.func @_gram_resident_kernel(%arg0: i32, %arg1: i32, %arg2: memref<32x128xf32, #tpu.memory_space<vmem>>, %arg3: memref<1x32x32xf32, #tpu.memory_space<vmem>>, %arg4: memref<32x32xf32, #tpu.memory_space<vmem>>) attributes {dimension_semantics = [#tpu.dimension_semantics<parallel>, #tpu.dimension_semantics<arbitrary>], iteration_bounds = array<i64: 1, 1>, scalar_prefetch = 0 : i64, scratch_operands = 1 : i64, tpu.core_type = #tpu.core_type<tc>, window_params = [{transform_indices = @transform_0, window_bounds = array<i64: 32, 128>}, {transform_indices = @transform_1, window_bounds = array<i64: 1, 32, 32>}]} {
    %c0_i32 = arith.constant 0 : i32
    %0 = arith.cmpi eq, %arg1, %c0_i32 : i32
    %1 = arith.extui %0 : i1 to i32
    %c0_i32_0 = arith.constant 0 : i32
    %2 = arith.cmpi ne, %1, %c0_i32_0 : i32
    scf.if %2 {
      %cst_8 = arith.constant 0.000000e+00 : f32
      %11 = vector.broadcast %cst_8 : f32 to vector<32x32xf32>
      %c0_9 = arith.constant 0 : index
      %c0_10 = arith.constant 0 : index
      %12 = vector.load %arg4[%c0_9, %c0_10] : memref<32x32xf32, #tpu.memory_space<vmem>>, vector<32x32xf32>
      tpu.vector_store %arg4[%c0_9, %c0_10], %11 {strides = array<i32>} : memref<32x32xf32, #tpu.memory_space<vmem>>, vector<32x32xf32>,
    } else {
    }
    %c0 = arith.constant 0 : index
    %c0_1 = arith.constant 0 : index
    %3 = vector.load %arg2[%c0, %c0_1] : memref<32x128xf32, #tpu.memory_space<vmem>>, vector<32x128xf32>
    %c0_2 = arith.constant 0 : index
    %c0_3 = arith.constant 0 : index
    %4 = vector.load %arg4[%c0_2, %c0_3] : memref<32x32xf32, #tpu.memory_space<vmem>>, vector<32x32xf32>
    %cst = arith.constant dense<0.000000e+00> : vector<32x32xf32>
    %5 = tpu.matmul %3, %3, %cst {dimension_numbers = #tpu.dot_dimension_numbers<[1], [1], [0], [0], [0, 0, 1, 0], [], []>} : vector<32x128xf32>, vector<32x128xf32>, vector<32x32xf32> -> vector<32x32xf32>
    %6 = arith.addf %4, %5 : vector<32x32xf32>
    %c0_4 = arith.constant 0 : index
    %c0_5 = arith.constant 0 : index
    %7 = vector.load %arg4[%c0_4, %c0_5] : memref<32x32xf32, #tpu.memory_space<vmem>>, vector<32x32xf32>
    tpu.vector_store %arg4[%c0_4, %c0_5], %6 {strides = array<i32>} : memref<32x32xf32, #tpu.memory_space<vmem>>, vector<32x32xf32>,
    %c0_i32_6 = arith.constant 0 : i32
    %8 = arith.cmpi eq, %arg1, %c0_i32_6 : i32
    %9 = arith.extui %8 : i1 to i32
    %c0_i32_7 = arith.constant 0 : i32
    %10 = arith.cmpi ne, %9, %c0_i32_7 : i32
    scf.if %10 {
      %c0_8 = arith.constant 0 : index
      %c0_9 = arith.constant 0 : index
      %11 = vector.load %arg4[%c0_8, %c0_9] : memref<32x32xf32, #tpu.memory_space<vmem>>, vector<32x32xf32>
      %c0_10 = arith.constant 0 : index
      %c0_11 = arith.constant 0 : index
      %c0_12 = arith.constant 0 : index
      %12 = vector.load %arg3[%c0_10, %c0_11, %c0_12] : memref<1x32x32xf32, #tpu.memory_space<vmem>>, vector<1x32x32xf32>
      %13 = vector.shape_cast %12 : vector<1x32x32xf32> to vector<32x32xf32>
      %14 = vector.shape_cast %11 : vector<32x32xf32> to vector<1x32x32xf32>
      tpu.vector_store %arg3[%c0_10, %c0_11, %c0_12], %14 {strides = array<i32>} : memref<1x32x32xf32, #tpu.memory_space<vmem>>, vector<1x32x32xf32>,
    } else {
    }
    return
  }
  func.func @transform_0(%arg0: i32, %arg1: i32) -> (i32, i32) {
    %c1_i32 = arith.constant 1 : i32
    %0 = arith.muli %arg0, %c1_i32 : i32
    %1 = arith.addi %0, %arg1 : i32
    %c0_i32 = arith.constant 0 : i32
    %c0_i32_0 = arith.constant 0 : i32
    return %c0_i32, %1 : i32, i32
  }
  func.func @transform_1(%arg0: i32, %arg1: i32) -> (i32, i32, i32) {
    %c0_i32 = arith.constant 0 : i32
    %c0_i32_0 = arith.constant 0 : i32
    %c0_i32_1 = arith.constant 0 : i32
    return %arg0, %c0_i32, %c0_i32_0 : i32, i32, i32
  }
}

</mosaic_0001>

<llo_original>
// kernel: gram_matrix_padded.1
$region0: #{gram_matrix_padded.1}
  #allocation0 [shape = 'u32[]', space=smem, size = 0x4, offset = 0x4, fixed_abs, tag = 'smem constant byte address 0x4 - core index']
  #allocation1 [shape = 'u32[144,128]{1,0:T(1,128)}', space=vmem, size = 0x12000, scoped, tag = 'internal scratch']
  #allocation2 [shape = 'f32[32,32]{1,0:T(8,128)}', space=vmem, size = 0x4000, scoped, tag = 'scratch operand']
  %s0 = inlined_call_operand.vmem [shape: f32[32,128], index: 0, kind: input, shape index: {}]
  %s1 = inlined_call_operand.vmem [shape: f32[1,32,32], index: 1, kind: output, shape index: {}]
  %s2 = sld [smem:[#allocation0]]
  $region22: #{gram_matrix_padded.1} parent=0
    _
  %s4 = ssub.s32 1, %s2
  %s5 = scalar_select 0, %s4, %s2
  // Predicated region
  $region2: #{gram_matrix_padded.1} parent=0 // pred_check
    _
  $region3: #{gram_matrix_padded.1} parent=0 // pred_check_branch
    %7 = sbr.rel (0) target = $region5
  $region4: #{gram_matrix_padded.1} parent=0 // pred_region
    %s8 = sadd.s32 0, 0
    %p9 = scmp.lt.s32.totalorder %s8, 0
    %s10 = scalar_select %p9, %s8, 0
    %s11 = smul.addr %s10, 8
    %s12 = scalar_lea.vmem %s0, %s11
    %s13 = sadd.s32 0, 0
  $region5: #{gram_matrix_padded.1} parent=0 // pred_fallthru
    _
  %s14 = sadd.s32 0, 0
  %p15 = scmp.lt.s32.totalorder %s14, 0
  %s16 = scalar_select %p15, %s14, 0
  %s17 = smul.addr %s16, 8
  %s18 = scalar_lea.vmem %s0, %s17
  %s19 = sadd.s32 0, 0
  %p20 = scmp.lt.s32.totalorder %s19, 0
  %s21 = scalar_select %p20, %s19, 0
  %s22 = smul.addr %s21, 8
  %s23 = scalar_lea.vmem %s0, %s22
  %s24 = sadd.s32 0, 0
  %p25 = scmp.eq.s32.totalorder 0, 0
  // Predicated region
  $region6: #{gram_matrix_padded.1} parent=0 // pred_check
    %p26 = pneg %p25
  $region7: #{gram_matrix_padded.1} parent=0 // pred_check_branch
    %28 = sbr.rel (%p26) target = $region9
  $region8: #{gram_matrix_padded.1} parent=0 // pred_region
    %vm29 = vcmask 261120
    %30 = vst.msk [vmem:[#allocation2] sm:$0xff] %vm29, 0.0
    %31 = vst.msk [vmem:[#allocation2 + $0x8] sm:$0xff] %vm29, 0.0
    %32 = vst.msk [vmem:[#allocation2 + $0x10] sm:$0xff] %vm29, 0.0
    %33 = vst.msk [vmem:[#allocation2 + $0x18] sm:$0xff] %vm29, 0.0
  $region9: #{gram_matrix_padded.1} parent=0 // pred_fallthru
    _
  %v34 = vld [vmem:[%s23] sm:$0xff]
  %v35 = vld [vmem:[%s23 + $0x8] sm:$0xff]
  %v36 = vld [vmem:[%s23 + $0x10] sm:$0xff]
  %v37 = vld [vmem:[%s23 + $0x18] sm:$0xff]
  %v38 = vld [vmem:[#allocation2] sm:$0xff]
  %v39 = vld [vmem:[#allocation2 + $0x8] sm:$0xff]
  %v40 = vld [vmem:[#allocation2 + $0x10] sm:$0xff]
  %v41 = vld [vmem:[#allocation2 + $0x18] sm:$0xff]
  %42 = vmatprep.subr.mxu0 0.0
  %43 = vmatpush1.xpose.msra.mxu0 %v34
  %44 = vmatprep.subr.mxu0 0.0
  %45 = vmatpush1.xpose.msra.mxu0 %v35
  %46 = vmatprep.subr.mxu0 0.0
  %47 = vmatpush1.xpose.msra.mxu0 %v36
  %48 = vmatprep.subr.mxu0 0.0
  %49 = vmatpush1.xpose.msra.mxu0 %v37
  %50 = vmatprep.subr.mxu0 0.0
  %51 = vmatpush1.xpose.msra.mxu0 0.0
  %52 = vmatprep.subr.mxu0 0.0
  %53 = vmatpush1.xpose.msra.mxu0 0.0
  %54 = vmatprep.subr.mxu0 0.0
  %55 = vmatpush1.xpose.msra.mxu0 0.0
  %56 = vmatprep.subr.mxu0 0.0
  %57 = vmatpush1.xpose.msra.mxu0 0.0
  %58 = vmatprep.subr.mxu0 0.0
  %59 = vmatpush1.xpose.msra.mxu0 0.0
  %60 = vmatprep.subr.mxu0 0.0
  %61 = vmatpush1.xpose.msra.mxu0 0.0
  %62 = vmatprep.subr.mxu0 0.0
  %63 = vmatpush1.xpose.msra.mxu0 0.0
  %64 = vmatprep.subr.mxu0 0.0
  %65 = vmatpush1.xpose.msra.mxu0 0.0
  %66 = vmatprep.subr.mxu0 0.0
  %67 = vmatpush1.xpose.msra.mxu0 0.0
  %68 = vmatprep.subr.mxu0 0.0
  %69 = vmatpush1.xpose.msra.mxu0 0.0
  %70 = vmatprep.subr.mxu0 0.0
  %71 = vmatpush1.xpose.msra.mxu0 0.0
  %72 = vmatprep.subr.mxu0 0.0
  %73 = vmatpush1.xpose.msra.mxu0 0.0
  %74 = vmatprep.subr.mxu0 0.0
  %75 = vmatpush1.xpose.msra.mxu0 0.0
  %76 = vmatprep.subr.mxu0 0.0
  %77 = vmatpush1.xpose.msra.mxu0 0.0
  %78 = vmatprep.subr.mxu0 0.0
  %79 = vmatpush1.xpose.msra.mxu0 0.0
  %80 = vmatprep.subr.mxu0 0.0
  %81 = vmatpush1.xpose.msra.mxu0 0.0
  %82 = vmatprep.subr.mxu0 0.0
  %83 = vmatpush1.xpose.msra.mxu0 0.0
  %84 = vmatprep.subr.mxu0 0.0
  %85 = vmatpush1.xpose.msra.mxu0 0.0
  %86 = vmatprep.subr.mxu0 0.0
  %87 = vmatpush1.xpose.msra.mxu0 0.0
  %88 = vmatprep.subr.mxu0 0.0
  %89 = vmatpush1.xpose.msra.mxu0 0.0
  %90 = vmatprep.subr.mxu0 0.0
  %91 = vmatpush1.xpose.msra.mxu0 0.0
  %92 = vmatprep.subr.mxu0 0.0
  %93 = vmatpush1.xpose.msra.mxu0 0.0
  %94 = vmatprep.subr.mxu0 0.0
  %95 = vmatpush1.xpose.msra.mxu0 0.0
  %96 = vmatprep.subr.mxu0 0.0
  %97 = vmatpush1.xpose.msra.mxu0 0.0
  %98 = vmatprep.subr.mxu0 0.0
  %99 = vmatpush1.xpose.msra.mxu0 0.0
  %100 = vmatprep.subr.mxu0 0.0
  %101 = vmatpush1.xpose.msra.mxu0 0.0
  %102 = vmatprep.subr.mxu0 0.0
  %103 = vmatpush1.xpose.msra.mxu0 0.0
  %104 = vmatprep.subr.mxu0 0.0
  %105 = vmatpush1.xpose.msra.mxu0 0.0
  %106 = vmatprep.mubr.f32.mxu0 0.0
  %107 = vmatmul.mubr.f32.gmra.mrb[0].mxu0 %v34
  %v108 = vpop.f32.mrb[0].mxu0
  %v109 = vadd.f32 0.0, %v108
  %v110 = vpop.f32.mrb[0].mxu0
  %111 = vmatprep.mubr.f32.mxu0 0.0
  %112 = vmatmul.mubr.f32.gmra.mrb[0].mxu0 %v35
  %v113 = vpop.f32.mrb[0].mxu0
  %v114 = vadd.f32 0.0, %v113
  %v115 = vpop.f32.mrb[0].mxu0
  %116 = vmatprep.mubr.f32.mxu0 0.0
  %117 = vmatmul.mubr.f32.gmra.mrb[0].mxu0 %v36
  %v118 = vpop.f32.mrb[0].mxu0
  %v119 = vadd.f32 0.0, %v118
  %v120 = vpop.f32.mrb[0].mxu0
  %121 = vmatprep.mubr.f32.mxu0 0.0
  %122 = vmatmul.mubr.f32.gmra.mrb[0].mxu0 %v37
  %v123 = vpop.f32.mrb[0].mxu0
  %v124 = vadd.f32 0.0, %v123
  %v125 = vpop.f32.mrb[0].mxu0
  %126 = vdwg.mxu0
  %v127 = vadd.f32 %v38, %v109
  %v128 = vadd.f32 %v39, %v114
  %v129 = vadd.f32 %v40, %v119
  %v130 = vadd.f32 %v41, %v124
  %vm131 = vcmask 261120
  %132 = vst.msk [vmem:[#allocation2] sm:$0xff] %vm131, %v127
  %133 = vst.msk [vmem:[#allocation2 + $0x8] sm:$0xff] %vm131, %v128
  %134 = vst.msk [vmem:[#allocation2 + $0x10] sm:$0xff] %vm131, %v129
  %135 = vst.msk [vmem:[#allocation2 + $0x18] sm:$0xff] %vm131, %v130
  // Predicated region
  $region10: #{gram_matrix_padded.1} parent=0 // pred_check
    %p136 = pneg %p25
  $region11: #{gram_matrix_padded.1} parent=0 // pred_check_branch
    %138 = sbr.rel (%p136) target = $region13
  $region12: #{gram_matrix_padded.1} parent=0 // pred_region
    %v139 = vld [vmem:[#allocation2] sm:$0xff]
    %v140 = vld [vmem:[#allocation2 + $0x8] sm:$0xff]
    %v141 = vld [vmem:[#allocation2 + $0x10] sm:$0xff]
    %v142 = vld [vmem:[#allocation2 + $0x18] sm:$0xff]
    %143 = vst.msk [vmem:[%s1] sm:$0xff] %vm131, %v139
    %144 = vst.msk [vmem:[%s1 + $0x8] sm:$0xff] %vm131, %v140
    %145 = vst.msk [vmem:[%s1 + $0x10] sm:$0xff] %vm131, %v141
    %146 = vst.msk [vmem:[%s1 + $0x18] sm:$0xff] %vm131, %v142
  $region13: #{gram_matrix_padded.1} parent=0 // pred_fallthru
    _
  // Predicated region
  $region14: #{gram_matrix_padded.1} parent=0 // pred_check
    _
  $region15: #{gram_matrix_padded.1} parent=0 // pred_check_branch
    %148 = sbr.rel (0) target = $region17
  $region16: #{gram_matrix_padded.1} parent=0 // pred_region
    _
  $region17: #{gram_matrix_padded.1} parent=0 // pred_fallthru
    _
  // Predicated region
  $region18: #{gram_matrix_padded.1} parent=0 // pred_check
    _
  $region19: #{gram_matrix_padded.1} parent=0 // pred_check_branch
    %150 = sbr.rel (0) target = $region21
  $region20: #{gram_matrix_padded.1} parent=0 // pred_region
    _
  $region21: #{gram_matrix_padded.1} parent=0 // pred_fallthru
    _

</llo_original>
